<compile_context>
chip_gen: v7x
topology: tpu7x:2x2x1
jax: 0.10.0
libtpu: 0.0.40
codegen_flags: <defaults>
</compile_context>

<pallas_src>
import functools

import numpy as np
import jax
import jax.numpy as jnp
from jax import lax
from jax.experimental import pallas as pl
from jax.experimental.pallas import tpu as pltpu


def _round_up(x, m):
    return ((x + m - 1) // m) * m


def _avg_pool_2x2_ceil(x):
    """nn.AvgPool2d(kernel=(2,2), stride=(2,2), padding=0, ceil_mode=True)."""
    _, _, H, W = x.shape
    ho = -(-H // 2)
    wo = -(-W // 2)
    pad = ((0, 0), (0, 0), (0, 2 * ho - H), (0, 2 * wo - W))
    win = (1, 1, 2, 2)
    summed = lax.reduce_window(x, 0.0, lax.add, win, win, pad)
    counts = lax.reduce_window(jnp.ones_like(x), 0.0, lax.add, win, win, pad)
    return summed / counts


def _l2_normalize_channels(x, eps=1e-12):
    """F.normalize(x, p=2, dim=1)."""
    norm = jnp.sqrt(jnp.sum(x * x, axis=1, keepdims=True))
    return x / jnp.maximum(norm, eps)


def _pixel_pair_kernel(s_ref, t_ref, bias_ref, out_ref, *, tile_q, inv_temp):
    """One grid step = one (batch, query-tile) pair.

    s_ref/t_ref: (1, C, HW_pad) bf16  student / teacher pixel features (batch b)
    bias_ref   : (1, HW_pad)    f32   0 on valid pixels, -1e30 on padded columns
    out_ref    : (1, 1, 1, 1)   f32   partial KL summed over this query tile
    """
    qi = pl.program_id(1)
    q0 = pl.multiple_of(qi * tile_q, tile_q)

    xs_k = s_ref[0]                                   # (C, HW_pad) bf16 keys
    xt_k = t_ref[0]

    # Query tiles are slices of the resident key block (no second feature DMA).
    # Transpose the small (C, TILE_Q) tile in f32 (cheap XLU work, lossless
    # round-trip), back to bf16 for the MXU.
    xs_q = jnp.transpose(
        s_ref[0, :, pl.ds(q0, tile_q)].astype(jnp.float32)).astype(jnp.bfloat16)
    xt_q = jnp.transpose(
        t_ref[0, :, pl.ds(q0, tile_q)].astype(jnp.float32)).astype(jnp.bfloat16)

    inv_t = jnp.float32(inv_temp)
    bias = bias_ref[...]                              # (1, HW_pad) f32

    # (TILE_Q, HW_pad) self-similarity logits: bf16 MXU, f32 accumulation.
    s = jnp.dot(xs_q, xs_k, preferred_element_type=jnp.float32) * inv_t + bias
    t = jnp.dot(xt_q, xt_k, preferred_element_type=jnp.float32) * inv_t + bias

    # Masked softmax over the key axis (axis=1).  exp of the -1e30-biased
    # padded columns underflows to exactly 0, so no selects are needed.
    s_max = jnp.max(s, axis=1, keepdims=True)
    t_max = jnp.max(t, axis=1, keepdims=True)
    s_exp = jnp.exp(s - s_max)
    t_exp = jnp.exp(t - t_max)
    s_den = jnp.sum(s_exp, axis=1, keepdims=True)     # >= 1, never 0
    t_den = jnp.sum(t_exp, axis=1, keepdims=True)

    # p_t * (log p_t - log p_s); padded rows/columns contribute exactly 0.
    p_t = t_exp * pl.reciprocal(t_den, approx=True)
    log_ratio = (t - s) + (s_max - t_max) + (jnp.log(s_den) - jnp.log(t_den))

    row_kl = jnp.sum(p_t * log_ratio, axis=1, keepdims=True)   # (TILE_Q, 1)
    tile_kl = jnp.sum(row_kl, axis=0, keepdims=True)           # (1, 1)
    out_ref[...] = tile_kl.reshape(1, 1, 1, 1)


def criterion_pixel_pair(feat_S, feat_T, *, temperature=0.1, tile_q=256):
    """JAX/Pallas equivalent of CriterionPixelPair.forward."""
    xs = _l2_normalize_channels(_avg_pool_2x2_ceil(feat_S.astype(jnp.float32)))
    xt = _l2_normalize_channels(_avg_pool_2x2_ceil(feat_T.astype(jnp.float32)))
    B, C, hp, wp = xs.shape
    hw = hp * wp

    # Natural NCHW flatten -> (B, C, HW): no transpose pass, HW is the lane dim.
    xs = xs.reshape(B, C, hw)
    xt = xt.reshape(B, C, hw)

    # Tile the pixel (query) axis; pad HW to a multiple of the tile.  The
    # default tile of 256 keeps the logits lane/MXU-aligned on v6e/v7x and fits
    # v7x's 64 MiB VMEM; v5e/v6e (128 MiB) can use tile_q=512.
    tile = min(tile_q, _round_up(hw, 128))
    hw_pad = _round_up(hw, tile)
    if hw_pad != hw:
        pad = ((0, 0), (0, 0), (0, hw_pad - hw))
        xs = jnp.pad(xs, pad)
        xt = jnp.pad(xt, pad)

    # bf16 features into the kernel (native MXU path, half the HBM traffic);
    # all post-matmul math stays f32 inside the kernel.
    xs = xs.astype(jnp.bfloat16)
    xt = xt.astype(jnp.bfloat16)

    # Additive key mask: 0 on valid pixels, -1e30 on padded columns.
    bias = jnp.where(jnp.arange(hw_pad) < hw, 0.0, -1e30)
    bias = bias.astype(jnp.float32).reshape(1, hw_pad)

    n_q = hw_pad // tile
    kernel = functools.partial(_pixel_pair_kernel, tile_q=tile,
                               inv_temp=float(1.0 / temperature))

    partial_kl = pl.pallas_call(
        kernel,
        out_shape=jax.ShapeDtypeStruct((B, n_q, 1, 1), jnp.float32),
        grid_spec=pltpu.PrefetchScalarGridSpec(
            num_scalar_prefetch=0,
            grid=(B, n_q),
            in_specs=[
                pl.BlockSpec((1, C, hw_pad), lambda b, q: (b, 0, 0)),  # student
                pl.BlockSpec((1, C, hw_pad), lambda b, q: (b, 0, 0)),  # teacher
                pl.BlockSpec((1, hw_pad), lambda b, q: (0, 0)),        # pad bias
            ],
            out_specs=pl.BlockSpec((1, 1, 1, 1), lambda b, q: (b, q, 0, 0)),
        ),
        compiler_params=pltpu.CompilerParams(
            dimension_semantics=("parallel", "parallel"),
            vmem_limit_bytes=48 * 1024 * 1024,
        ),
    )(xs, xt, bias)

    # Per-row KL summed per tile -> batchmean over HW, then mean over batch.
    return jnp.sum(partial_kl) / jnp.float32(hw * B)


def _reference(feat_S, feat_T, *, temperature):
    """Plain-JAX replica of the PyTorch forward, using the same bf16 feature
    quantization as the kernel so the comparison isolates kernel correctness."""
    xs = _l2_normalize_channels(_avg_pool_2x2_ceil(feat_S.astype(jnp.float32)))
    xt = _l2_normalize_channels(_avg_pool_2x2_ceil(feat_T.astype(jnp.float32)))
    B, C, hp, wp = xs.shape
    hw = hp * wp
    xs = xs.reshape(B, C, hw).astype(jnp.bfloat16).astype(jnp.float32)
    xt = xt.reshape(B, C, hw).astype(jnp.bfloat16).astype(jnp.float32)
    total = jnp.float32(0.0)
    for i in range(B):
        s = (xs[i].T @ xs[i]) / temperature            # (HW, HW)
        t = (xt[i].T @ xt[i]) / temperature
        log_ps = jax.nn.log_softmax(s, axis=1)
        log_pt = jax.nn.log_softmax(t, axis=1)
        p_t = jax.nn.softmax(t, axis=1)
        total = total + jnp.sum(p_t * (log_pt - log_ps)) / hw   # batchmean
    return total / B


if __name__ == "__main__":
    B, C, H, W = 2, 32, 16, 16      # pooled -> 8x8 = 64 pixels (padded to 128)
    TEMPERATURE = 0.1

    key = jax.random.PRNGKey(0)
    k1, k2 = jax.random.split(key)
    feat_S = jax.random.normal(k1, (B, C, H, W), dtype=jnp.float32)
    feat_T = jax.random.normal(k2, (B, C, H, W), dtype=jnp.float32)

    loss_fn = jax.jit(functools.partial(criterion_pixel_pair,
                                        temperature=TEMPERATURE))
    loss = jax.block_until_ready(loss_fn(feat_S, feat_T))

    ref = jax.block_until_ready(_reference(feat_S, feat_T,
                                           temperature=TEMPERATURE))
    np.testing.assert_allclose(float(loss), float(ref), rtol=5e-3, atol=1e-5)
    print("KERNEL_OK")
</pallas_src>

<mosaic_0001>
module attributes {stable_mosaic.version = 11 : i64} {
  func.func @_pixel_pair_kernel(%arg0: i32, %arg1: i32, %arg2: memref<1x32x128xbf16, #tpu.memory_space<vmem>>, %arg3: memref<1x32x128xbf16, #tpu.memory_space<vmem>>, %arg4: memref<1x128xf32, #tpu.memory_space<vmem>>, %arg5: memref<1x1x1x1xf32, #tpu.memory_space<vmem>>) attributes {dimension_semantics = [#tpu.dimension_semantics<parallel>, #tpu.dimension_semantics<parallel>], iteration_bounds = array<i64: 2, 1>, scalar_prefetch = 0 : i64, scratch_operands = 0 : i64, tpu.core_type = #tpu.core_type<tc>, window_params = [{transform_indices = @transform_0, window_bounds = array<i64: 1, 32, 128>}, {transform_indices = @transform_1, window_bounds = array<i64: 1, 32, 128>}, {pipeline_mode = #tpu.pipeline_mode<synchronous>, transform_indices = @transform_2, window_bounds = array<i64: 1, 128>}, {transform_indices = @transform_3, window_bounds = array<i64: 1, 1, 1, 1>}]} {
    %c128_i32 = arith.constant 128 : i32
    %0 = arith.muli %arg1, %c128_i32 : i32
    %1 = tpu.assume_multiple %0, 128 : i32
    %c0 = arith.constant 0 : index
    %c0_0 = arith.constant 0 : index
    %c0_1 = arith.constant 0 : index
    %2 = vector.load %arg2[%c0, %c0_0, %c0_1] : memref<1x32x128xbf16, #tpu.memory_space<vmem>>, vector<1x32x128xbf16>
    %3 = vector.shape_cast %2 : vector<1x32x128xbf16> to vector<32x128xbf16>
    %c0_2 = arith.constant 0 : index
    %c0_3 = arith.constant 0 : index
    %c0_4 = arith.constant 0 : index
    %4 = vector.load %arg3[%c0_2, %c0_3, %c0_4] : memref<1x32x128xbf16, #tpu.memory_space<vmem>>, vector<1x32x128xbf16>
    %5 = vector.shape_cast %4 : vector<1x32x128xbf16> to vector<32x128xbf16>
    %c0_5 = arith.constant 0 : index
    %c0_6 = arith.constant 0 : index
    %6 = arith.index_cast %1 : i32 to index
    %7 = vector.load %arg2[%c0_5, %c0_6, %6] : memref<1x32x128xbf16, #tpu.memory_space<vmem>>, vector<1x32x128xbf16>
    %8 = vector.shape_cast %7 : vector<1x32x128xbf16> to vector<32x128xbf16>
    %9 = arith.extf %8 : vector<32x128xbf16> to vector<32x128xf32>
    %10 = tpu.transpose %9, [1, 0] : vector<32x128xf32> -> vector<128x32xf32>
    %11 = arith.truncf %10 : vector<128x32xf32> to vector<128x32xbf16>
    %c0_7 = arith.constant 0 : index
    %c0_8 = arith.constant 0 : index
    %12 = arith.index_cast %1 : i32 to index
    %13 = vector.load %arg3[%c0_7, %c0_8, %12] : memref<1x32x128xbf16, #tpu.memory_space<vmem>>, vector<1x32x128xbf16>
    %14 = vector.shape_cast %13 : vector<1x32x128xbf16> to vector<32x128xbf16>
    %15 = arith.extf %14 : vector<32x128xbf16> to vector<32x128xf32>
    %16 = tpu.transpose %15, [1, 0] : vector<32x128xf32> -> vector<128x32xf32>
    %17 = arith.truncf %16 : vector<128x32xf32> to vector<128x32xbf16>
    %c0_9 = arith.constant 0 : index
    %c0_10 = arith.constant 0 : index
    %18 = vector.load %arg4[%c0_9, %c0_10] : memref<1x128xf32, #tpu.memory_space<vmem>>, vector<1x128xf32>
    %cst = arith.constant dense<0.000000e+00> : vector<128x128xf32>
    %19 = tpu.matmul %11, %3, %cst {dimension_numbers = #tpu.dot_dimension_numbers<[1], [0], [0], [1], [0, 0, 1, 1], [], []>} : vector<128x32xbf16>, vector<32x128xbf16>, vector<128x128xf32> -> vector<128x128xf32>
    %cst_11 = arith.constant 1.000000e+01 : f32
    %20 = vector.broadcast %cst_11 : f32 to vector<128x128xf32>
    %21 = arith.mulf %19, %20 : vector<128x128xf32>
    %22 = vector.broadcast %18 : vector<1x128xf32> to vector<128x128xf32>
    %23 = arith.addf %21, %22 : vector<128x128xf32>
    %cst_12 = arith.constant dense<0.000000e+00> : vector<128x128xf32>
    %24 = tpu.matmul %17, %5, %cst_12 {dimension_numbers = #tpu.dot_dimension_numbers<[1], [0], [0], [1], [0, 0, 1, 1], [], []>} : vector<128x32xbf16>, vector<32x128xbf16>, vector<128x128xf32> -> vector<128x128xf32>
    %cst_13 = arith.constant 1.000000e+01 : f32
    %25 = vector.broadcast %cst_13 : f32 to vector<128x128xf32>
    %26 = arith.mulf %24, %25 : vector<128x128xf32>
    %27 = vector.broadcast %18 : vector<1x128xf32> to vector<128x128xf32>
    %28 = arith.addf %26, %27 : vector<128x128xf32>
    %cst_14 = arith.constant dense<0xFF800000> : vector<128xf32>
    %29 = vector.multi_reduction <maximumf>, %23, %cst_14 [1] : vector<128x128xf32> to vector<128xf32>
    %30 = vector.shape_cast %29 : vector<128xf32> to vector<128x1xf32>
    %cst_15 = arith.constant dense<0xFF800000> : vector<128xf32>
    %31 = vector.multi_reduction <maximumf>, %28, %cst_15 [1] : vector<128x128xf32> to vector<128xf32>
    %32 = vector.shape_cast %31 : vector<128xf32> to vector<128x1xf32>
    %33 = vector.broadcast %30 : vector<128x1xf32> to vector<128x128xf32>
    %34 = arith.subf %23, %33 : vector<128x128xf32>
    %35 = math.exp %34 : vector<128x128xf32>
    %36 = vector.broadcast %32 : vector<128x1xf32> to vector<128x128xf32>
    %37 = arith.subf %28, %36 : vector<128x128xf32>
    %38 = math.exp %37 : vector<128x128xf32>
    %cst_16 = arith.constant dense<0.000000e+00> : vector<128xf32>
    %39 = vector.multi_reduction <add>, %35, %cst_16 [1] : vector<128x128xf32> to vector<128xf32>
    %40 = vector.shape_cast %39 : vector<128xf32> to vector<128x1xf32>
    %cst_17 = arith.constant dense<0.000000e+00> : vector<128xf32>
    %41 = vector.multi_reduction <add>, %38, %cst_17 [1] : vector<128x128xf32> to vector<128xf32>
    %42 = vector.shape_cast %41 : vector<128xf32> to vector<128x1xf32>
    %43 = tpu.reciprocal %42 {approx = true} : vector<128x1xf32> -> vector<128x1xf32>
    %44 = vector.broadcast %43 : vector<128x1xf32> to vector<128x128xf32>
    %45 = arith.mulf %38, %44 : vector<128x128xf32>
    %46 = arith.subf %28, %23 : vector<128x128xf32>
    %47 = arith.subf %30, %32 : vector<128x1xf32>
    %48 = vector.broadcast %47 : vector<128x1xf32> to vector<128x128xf32>
    %49 = arith.addf %46, %48 : vector<128x128xf32>
    %50 = math.log %40 : vector<128x1xf32>
    %51 = math.log %42 : vector<128x1xf32>
    %52 = arith.subf %50, %51 : vector<128x1xf32>
    %53 = vector.broadcast %52 : vector<128x1xf32> to vector<128x128xf32>
    %54 = arith.addf %49, %53 : vector<128x128xf32>
    %55 = arith.mulf %45, %54 : vector<128x128xf32>
    %cst_18 = arith.constant dense<0.000000e+00> : vector<128xf32>
    %56 = vector.multi_reduction <add>, %55, %cst_18 [1] : vector<128x128xf32> to vector<128xf32>
    %57 = vector.shape_cast %56 : vector<128xf32> to vector<128x1xf32>
    %cst_19 = arith.constant dense<0.000000e+00> : vector<1xf32>
    %58 = vector.multi_reduction <add>, %57, %cst_19 [0] : vector<128x1xf32> to vector<1xf32>
    %59 = vector.shape_cast %58 : vector<1xf32> to vector<1x1xf32>
    %60 = vector.shape_cast %59 : vector<1x1xf32> to vector<1x1x1x1xf32>
    %c0_20 = arith.constant 0 : index
    %c0_21 = arith.constant 0 : index
    %c0_22 = arith.constant 0 : index
    %c0_23 = arith.constant 0 : index
    %61 = vector.load %arg5[%c0_20, %c0_21, %c0_22, %c0_23] : memref<1x1x1x1xf32, #tpu.memory_space<vmem>>, vector<1x1x1x1xf32>
    tpu.vector_store %arg5[%c0_20, %c0_21, %c0_22, %c0_23], %60 {strides = array<i32>} : memref<1x1x1x1xf32, #tpu.memory_space<vmem>>, vector<1x1x1x1xf32>,
    return
  }
  func.func @transform_0(%arg0: i32, %arg1: i32) -> (i32, i32, i32) {
    %c0_i32 = arith.constant 0 : i32
    %c0_i32_0 = arith.constant 0 : i32
    %c0_i32_1 = arith.constant 0 : i32
    return %arg0, %c0_i32, %c0_i32_0 : i32, i32, i32
  }
  func.func @transform_1(%arg0: i32, %arg1: i32) -> (i32, i32, i32) {
    %c0_i32 = arith.constant 0 : i32
    %c0_i32_0 = arith.constant 0 : i32
    %c0_i32_1 = arith.constant 0 : i32
    return %arg0, %c0_i32, %c0_i32_0 : i32, i32, i32
  }
  func.func @transform_2(%arg0: i32, %arg1: i32) -> (i32, i32) {
    %c0_i32 = arith.constant 0 : i32
    %c0_i32_0 = arith.constant 0 : i32
    %c0_i32_1 = arith.constant 0 : i32
    return %c0_i32, %c0_i32_0 : i32, i32
  }
  func.func @transform_3(%arg0: i32, %arg1: i32) -> (i32, i32, i32, i32) {
    %c0_i32 = arith.constant 0 : i32
    %c0_i32_0 = arith.constant 0 : i32
    %c0_i32_1 = arith.constant 0 : i32
    return %arg0, %arg1, %c0_i32, %c0_i32_0 : i32, i32, i32, i32
  }
}

</mosaic_0001>

<llo_original>
// kernel: criterion_pixel_pair.1
$region0: #{criterion_pixel_pair.1}
  #allocation0 [shape = 'u32[]', space=smem, size = 0x4, offset = 0x4, fixed_abs, tag = 'smem constant byte address 0x4 - core index']
  #allocation1 [shape = 'u32[144,128]{1,0:T(1,128)}', space=vmem, size = 0x12000, scoped, tag = 'internal scratch']
  %s0 = inlined_call_operand.vmem [shape: bf16[2,32,128], index: 0, kind: input, shape index: {}]
  %s1 = inlined_call_operand.vmem [shape: bf16[2,32,128], index: 1, kind: input, shape index: {}]
  %s2 = inlined_call_operand.vmem [shape: f32[1,128], index: 2, kind: input, shape index: {}]
  %s3 = inlined_call_operand.vmem [shape: f32[2,1,1,1], index: 3, kind: output, shape index: {}]
  %s4 = sld [smem:[#allocation0]]
  $region45: #{criterion_pixel_pair.1} parent=0
    _
  %s6 = ssub.s32 1, %s4
  %s7 = scalar_select 0, %s6, %s4
  loop: start=0, step=1, limit=4
  $region2: #{criterion_pixel_pair.1} parent=0 // loop_pre_header
    _
  $region3: #{criterion_pixel_pair.1} parent=0 // loop_header
    %s9 = sphi 0, %s13
    %p10 = scmp.ge.s32.totalorder %s9, 4
    %s16 = sphi 0, %s28
    %s17 = sphi 0, %s24
    %s18 = sphi 0, %s16
    %s19 = sphi 0, %s17
    %s20 = sphi 0, %s18
    %s21 = sphi 0, %s19
    %s31 = sphi 0, %s33
    %s34 = sphi 0, %s31
    %s35 = sphi 0, %s34
    %s51 = sphi 0, %s35
    %s57 = sphi 0, %s59
    %s60 = sphi 0, %s57
    %s61 = sphi 0, %s60
    %s77 = sphi 0, %s61
    %s81 = sphi 0, %s81
    %s83 = sphi 0, %s81
    %s84 = sphi 0, %s83
    %s98 = sphi 0, %s84
    %s106 = sphi 0, %s108
    %s109 = sphi 0, %s106
    %s110 = sphi 0, %s109
    %s126 = sphi 0, %s110
  $region4: #{criterion_pixel_pair.1} parent=0 // loop_header_branch
    %12 = sbr.rel (%p10) target = $region8
  $region5: #{criterion_pixel_pair.1} parent=0 // loop_body
    %s14 = ssub.s32 %s9, 1
    %s15 = ssub.s32 %s9, 2
    %s22 = sadd.s32 1, %s17
    %p23 = scmp.ge.s32.totalorder %s22, 1
    %s24 = scalar_select %p23, 0, %s22
    %s25 = sadd.s32 1, %s16
    %s26 = scalar_select %p23, %s25, %s16
    %p27 = scmp.ge.s32.totalorder %s26, 2
    %s28 = scalar_select %p27, 0, %s26
    %s29 = ssub.s32 %s16, %s28
    %p30 = scmp.eq.s32.totalorder %s29, 0
    %s32 = sadd.s32 %s31, 1
    %s33 = scalar_select %p30, %s31, %s32
    %p36 = pneg %p30
    %p37 = scmp.eq.s32.totalorder %s9, 1
    %p38 = por %p36, %p37
    %p39 = scmp.ne.s32.totalorder %s31, %s34
    %p40 = scmp.eq.s32.totalorder %s9, 0
    %p41 = por %p39, %p40
    %p42 = scmp.ne.s32.totalorder %s31, %s34
    %p43 = scmp.eq.s32.totalorder %s14, 1
    %p44 = por %p42, %p43
    %p45 = scmp.ne.s32.totalorder %s34, %s35
    %p46 = scmp.eq.s32.totalorder %s14, 0
    %p47 = por %p45, %p46
    %p48 = scmp.ne.s32.totalorder %s34, %s35
    %p49 = scmp.eq.s32.totalorder %s15, 1
    %p50 = por %p48, %p49
    %p52 = scmp.ne.s32.totalorder %s35, %s51
    %p53 = scmp.eq.s32.totalorder %s15, 0
    %p54 = por %p52, %p53
    %s55 = ssub.s32 %s16, %s28
    %p56 = scmp.eq.s32.totalorder %s55, 0
    %s58 = sadd.s32 %s57, 1
    %s59 = scalar_select %p56, %s57, %s58
    %p62 = pneg %p56
    %p63 = scmp.eq.s32.totalorder %s9, 1
    %p64 = por %p62, %p63
    %p65 = scmp.ne.s32.totalorder %s57, %s60
    %p66 = scmp.eq.s32.totalorder %s9, 0
    %p67 = por %p65, %p66
    %p68 = scmp.ne.s32.totalorder %s57, %s60
    %p69 = scmp.eq.s32.totalorder %s14, 1
    %p70 = por %p68, %p69
    %p71 = scmp.ne.s32.totalorder %s60, %s61
    %p72 = scmp.eq.s32.totalorder %s14, 0
    %p73 = por %p71, %p72
    %p74 = scmp.ne.s32.totalorder %s60, %s61
    %p75 = scmp.eq.s32.totalorder %s15, 1
    %p76 = por %p74, %p75
    %p78 = scmp.ne.s32.totalorder %s61, %s77
    %p79 = scmp.eq.s32.totalorder %s15, 0
    %p80 = por %p78, %p79
    %s82 = sadd.s32 %s81, 1
    %p85 = scmp.eq.s32.totalorder %s9, 1
    %p86 = scmp.ne.s32.totalorder %s81, %s83
    %p87 = scmp.eq.s32.totalorder %s9, 0
    %p88 = por %p86, %p87
    %p89 = scmp.ne.s32.totalorder %s81, %s83
    %p90 = scmp.eq.s32.totalorder %s14, 1
    %p91 = por %p89, %p90
    %p92 = scmp.ne.s32.totalorder %s83, %s84
    %p93 = scmp.eq.s32.totalorder %s14, 0
    %p94 = por %p92, %p93
    %p95 = scmp.ne.s32.totalorder %s83, %s84
    %p96 = scmp.eq.s32.totalorder %s15, 1
    %p97 = por %p95, %p96
    %p99 = scmp.ne.s32.totalorder %s84, %s98
    %p100 = scmp.eq.s32.totalorder %s15, 0
    %p101 = por %p99, %p100
    %s102 = ssub.s32 %s16, %s28
    %s103 = ssub.s32 %s17, %s24
    %s104 = sor.u32 %s102, %s103
    %p105 = scmp.eq.s32.totalorder %s104, 0
    %s107 = sadd.s32 %s106, 1
    %s108 = scalar_select %p105, %s106, %s107
    %p111 = pneg %p105
    %p112 = scmp.eq.s32.totalorder %s9, 1
    %p113 = por %p111, %p112
    %p114 = scmp.ne.s32.totalorder %s106, %s109
    %p115 = scmp.eq.s32.totalorder %s9, 0
    %p116 = por %p114, %p115
    %p117 = scmp.ne.s32.totalorder %s106, %s109
    %p118 = scmp.eq.s32.totalorder %s14, 1
    %p119 = por %p117, %p118
    %p120 = scmp.ne.s32.totalorder %s109, %s110
    %p121 = scmp.eq.s32.totalorder %s14, 0
    %p122 = por %p120, %p121
    %p123 = scmp.ne.s32.totalorder %s109, %s110
    %p124 = scmp.eq.s32.totalorder %s15, 1
    %p125 = por %p123, %p124
    %p127 = scmp.ne.s32.totalorder %s110, %s126
    %p128 = scmp.eq.s32.totalorder %s15, 0
    %p129 = por %p127, %p128
    %p130 = scmp.le.s32.totalorder 1, %s9
    %p131 = scmp.lt.s32.totalorder %s9, 3
    %p132 = pnand %p130, %p131
    %p133 = pneg %p132
    // Predicated region
    $region9: #{criterion_pixel_pair.1} parent=5 // pred_check
      _
    $region10: #{criterion_pixel_pair.1} parent=5 // pred_check_branch
      %135 = sbr.rel (%p132) target = $region12
    $region11: #{criterion_pixel_pair.1} parent=5 // pred_region
      %s136 = ssub.s32 %s9, 1
      // Predicated region
      $region13: #{criterion_pixel_pair.1} parent=11 // pred_check
        %p137 = pneg %p94
      $region14: #{criterion_pixel_pair.1} parent=11 // pred_check_branch
        %139 = sbr.rel (%p137) target = $region16
      $region15: #{criterion_pixel_pair.1} parent=11 // pred_region
        _
      $region16: #{criterion_pixel_pair.1} parent=11 // pred_fallthru
        _
    $region12: #{criterion_pixel_pair.1} parent=5 // pred_fallthru
      _
    %p140 = scmp.lt.s32.totalorder %s9, 2
    // Predicated region
    $region17: #{criterion_pixel_pair.1} parent=5 // pred_check
      %p141 = pneg %p140
    $region18: #{criterion_pixel_pair.1} parent=5 // pred_check_branch
      %143 = sbr.rel (%p141) target = $region20
    $region19: #{criterion_pixel_pair.1} parent=5 // pred_region
      // Predicated region
      $region21: #{criterion_pixel_pair.1} parent=19 // pred_check
        %p144 = pneg %p41
      $region22: #{criterion_pixel_pair.1} parent=19 // pred_check_branch
        %146 = sbr.rel (%p144) target = $region24
      $region23: #{criterion_pixel_pair.1} parent=19 // pred_region
        %p147 = scmp.lt.s32.totalorder %s16, 1
        %s148 = scalar_select %p147, %s16, 1
        %s149 = smul.addr %s148, 4
        %s150 = smul.addr %s149, 4
        %s151 = scalar_lea.vmem %s0, %s150
      $region24: #{criterion_pixel_pair.1} parent=19 // pred_fallthru
        _
      // Predicated region
      $region25: #{criterion_pixel_pair.1} parent=19 // pred_check
        %p152 = pneg %p67
      $region26: #{criterion_pixel_pair.1} parent=19 // pred_check_branch
        %154 = sbr.rel (%p152) target = $region28
      $region27: #{criterion_pixel_pair.1} parent=19 // pred_region
        %p155 = scmp.lt.s32.totalorder %s16, 1
        %s156 = scalar_select %p155, %s16, 1
        %s157 = smul.addr %s156, 4
        %s158 = smul.addr %s157, 4
        %s159 = scalar_lea.vmem %s1, %s158
      $region28: #{criterion_pixel_pair.1} parent=19 // pred_fallthru
        _
    $region20: #{criterion_pixel_pair.1} parent=5 // pred_fallthru
      _
    %p160 = scmp.le.s32.totalorder 1, %s9
    %p161 = scmp.lt.s32.totalorder %s9, 3
    %p162 = pnand %p160, %p161
    %p163 = pneg %p162
    // Predicated region
    $region29: #{criterion_pixel_pair.1} parent=5 // pred_check
      _
    $region30: #{criterion_pixel_pair.1} parent=5 // pred_check_branch
      %165 = sbr.rel (%p162) target = $region32
    $region31: #{criterion_pixel_pair.1} parent=5 // pred_region
      %s166 = ssub.s32 %s9, 1
      %p167 = scmp.lt.s32.totalorder %s18, 1
      %s168 = scalar_select %p167, %s18, 1
      %s169 = smul.addr %s168, 4
      %s170 = smul.addr %s169, 4
      %s171 = scalar_lea.vmem %s0, %s170
      %p172 = pneg %p47
      %p173 = pneg %p44
      %p174 = scmp.lt.s32.totalorder %s18, 1
      %s175 = scalar_select %p174, %s18, 1
      %s176 = smul.addr %s175, 4
      %s177 = smul.addr %s176, 4
      %s178 = scalar_lea.vmem %s1, %s177
      %p179 = pneg %p73
      %p180 = pneg %p70
      %p181 = pneg %p94
      %p182 = pneg %p91
      %p183 = pneg %p122
      %p184 = pneg %p119
      %p185 = scmp.lt.s32.totalorder %s18, 1
      %s186 = scalar_select %p185, %s18, 1
      %p187 = scmp.lt.s32.totalorder %s19, 0
      %s188 = scalar_select %p187, %s19, 0
      %s189 = sadd.s32 %s188, %s186
      %s190 = scalar_lea.vmem %s3, %s189
      %p191 = scmp.lt.s32.totalorder %s18, 1
      %s192 = scalar_select %p191, %s18, 1
      %s193 = smul.addr %s192, 4
      %s194 = smul.addr %s193, 4
      %s195 = scalar_lea.vmem %s0, %s194
      %p196 = scmp.lt.s32.totalorder %s18, 1
      %s197 = scalar_select %p196, %s18, 1
      %s198 = smul.addr %s197, 4
      %s199 = smul.addr %s198, 4
      %s200 = scalar_lea.vmem %s1, %s199
      %p201 = scmp.lt.s32.totalorder %s18, 1
      %s202 = scalar_select %p201, %s18, 1
      %p203 = scmp.lt.s32.totalorder %s19, 0
      %s204 = scalar_select %p203, %s19, 0
      %s205 = sadd.s32 %s204, %s202
      %s206 = scalar_lea.vmem %s3, %s205
      %s208 = smul.u32 %s19, 128
      %v209 = vld [vmem:[%s195] sm:$0xf]
      %v210 = vld [vmem:[%s195 + $0x4] sm:$0xf]
      %v211 = vld [vmem:[%s195 + $0x8] sm:$0xf]
      %v212 = vld [vmem:[%s195 + $0xc] sm:$0xf]
      %v213 = vld [vmem:[%s200] sm:$0xf]
      %v214 = vld [vmem:[%s200 + $0x4] sm:$0xf]
      %v215 = vld [vmem:[%s200 + $0x8] sm:$0xf]
      %v216 = vld [vmem:[%s200 + $0xc] sm:$0xf]
      %s217 = sshra.s32 %s208, 7
      %s218 = sand.u32 %s208, 127
      %s219 = smul.addr %s217, 4
      %s220 = scalar_lea.vmem %s195, %s219
      %v221 = vld [vmem:[%s220] sm:$0xf]
      %v222 = vld [vmem:[%s220 + $0x4] sm:$0xf]
      %v223 = vld [vmem:[%s220 + $0x8] sm:$0xf]
      %v224 = vld [vmem:[%s220 + $0xc] sm:$0xf]
      %v225 = vunpack.c.l.bf16 %v221
      %v226 = vunpack.c.l.bf16 %v222
      %v227 = vunpack.c.l.bf16 %v223
      %v228 = vunpack.c.l.bf16 %v224
      %229 = vxpose.xlu0.b32.start [1/16] %v225, 128
      %230 = vxpose.xlu0.b32.cont [2/16] %v226, 128
      %231 = vxpose.xlu0.b32.cont [3/16] %v227, 128
      %232 = vxpose.xlu0.b32.cont [4/16] %v228, 128
      %233 = vxpose.xlu0.b32.cont [5/16] 0.0, 128
      %234 = vxpose.xlu0.b32.cont [6/16] 0.0, 128
      %235 = vxpose.xlu0.b32.cont [7/16] 0.0, 128
      %236 = vxpose.xlu0.b32.cont [8/16] 0.0, 128
      %237 = vxpose.xlu0.b32.cont [9/16] 0.0, 128
      %238 = vxpose.xlu0.b32.cont [10/16] 0.0, 128
      %239 = vxpose.xlu0.b32.cont [11/16] 0.0, 128
      %240 = vxpose.xlu0.b32.cont [12/16] 0.0, 128
      %241 = vxpose.xlu0.b32.cont [13/16] 0.0, 128
      %242 = vxpose.xlu0.b32.cont [14/16] 0.0, 128
      %243 = vxpose.xlu0.b32.cont [15/16] 0.0, 128
      %244 = vxpose.xlu0.b32.end [16/16] 0.0, 128
      %v245 = vpop.trf.xlu0
      %v246 = vpop.trf.xlu0
      %v247 = vpop.trf.xlu0
      %v248 = vpop.trf.xlu0
      %v249 = vpop.trf.xlu0
      %v250 = vpop.trf.xlu0
      %v251 = vpop.trf.xlu0
      %v252 = vpop.trf.xlu0
      %v253 = vpop.trf.xlu0
      %v254 = vpop.trf.xlu0
      %v255 = vpop.trf.xlu0
      %v256 = vpop.trf.xlu0
      %v257 = vpop.trf.xlu0
      %v258 = vpop.trf.xlu0
      %v259 = vpop.trf.xlu0
      %v260 = vpop.trf.xlu0
      %v261 = vpack.c.bf16 %v246, %v245
      %v262 = vpack.c.bf16 %v248, %v247
      %v263 = vpack.c.bf16 %v250, %v249
      %v264 = vpack.c.bf16 %v252, %v251
      %v265 = vpack.c.bf16 %v254, %v253
      %v266 = vpack.c.bf16 %v256, %v255
      %v267 = vpack.c.bf16 %v258, %v257
      %v268 = vpack.c.bf16 %v260, %v259
      %s269 = smul.addr %s217, 4
      %s270 = scalar_lea.vmem %s200, %s269
      %v271 = vld [vmem:[%s270] sm:$0xf]
      %v272 = vld [vmem:[%s270 + $0x4] sm:$0xf]
      %v273 = vld [vmem:[%s270 + $0x8] sm:$0xf]
      %v274 = vld [vmem:[%s270 + $0xc] sm:$0xf]
      %v275 = vunpack.c.l.bf16 %v271
      %v276 = vunpack.c.l.bf16 %v272
      %v277 = vunpack.c.l.bf16 %v273
      %v278 = vunpack.c.l.bf16 %v274
      %279 = vxpose.xlu0.b32.start [1/16] %v275, 128
      %280 = vxpose.xlu0.b32.cont [2/16] %v276, 128
      %281 = vxpose.xlu0.b32.cont [3/16] %v277, 128
      %282 = vxpose.xlu0.b32.cont [4/16] %v278, 128
      %283 = vxpose.xlu0.b32.cont [5/16] 0.0, 128
      %284 = vxpose.xlu0.b32.cont [6/16] 0.0, 128
      %285 = vxpose.xlu0.b32.cont [7/16] 0.0, 128
      %286 = vxpose.xlu0.b32.cont [8/16] 0.0, 128
      %287 = vxpose.xlu0.b32.cont [9/16] 0.0, 128
      %288 = vxpose.xlu0.b32.cont [10/16] 0.0, 128
      %289 = vxpose.xlu0.b32.cont [11/16] 0.0, 128
      %290 = vxpose.xlu0.b32.cont [12/16] 0.0, 128
      %291 = vxpose.xlu0.b32.cont [13/16] 0.0, 128
      %292 = vxpose.xlu0.b32.cont [14/16] 0.0, 128
      %293 = vxpose.xlu0.b32.cont [15/16] 0.0, 128
      %294 = vxpose.xlu0.b32.end [16/16] 0.0, 128
      %v295 = vpop.trf.xlu0
      %v296 = vpop.trf.xlu0
      %v297 = vpop.trf.xlu0
      %v298 = vpop.trf.xlu0
      %v299 = vpop.trf.xlu0
      %v300 = vpop.trf.xlu0
      %v301 = vpop.trf.xlu0
      %v302 = vpop.trf.xlu0
      %v303 = vpop.trf.xlu0
      %v304 = vpop.trf.xlu0
      %v305 = vpop.trf.xlu0
      %v306 = vpop.trf.xlu0
      %v307 = vpop.trf.xlu0
      %v308 = vpop.trf.xlu0
      %v309 = vpop.trf.xlu0
      %v310 = vpop.trf.xlu0
      %v311 = vpack.c.bf16 %v296, %v295
      %v312 = vpack.c.bf16 %v298, %v297
      %v313 = vpack.c.bf16 %v300, %v299
      %v314 = vpack.c.bf16 %v302, %v301
      %v315 = vpack.c.bf16 %v304, %v303
      %v316 = vpack.c.bf16 %v306, %v305
      %v317 = vpack.c.bf16 %v308, %v307
      %v318 = vpack.c.bf16 %v310, %v309
      %v319 = vld [vmem:[%s2] sm:$0x1]
      %v324 = vunpack.c.l.b16 %v209
      %v325 = vunpack.c.l.b16 %v210
      %v326 = vunpack.c.l.b16 %v211
      %v327 = vunpack.c.l.b16 %v212
      %v328 = vpack.c.b16 %v325, %v324
      %v329 = vpack.c.b16 %v327, %v326
      %vm332 = vcmask 261120
      %v334 = vsel %vm332, %v261, 0
      %v337 = vsel %vm332, %v262, 0
      %v340 = vsel %vm332, %v263, 0
      %v343 = vsel %vm332, %v264, 0
      %v346 = vsel %vm332, %v265, 0
      %v349 = vsel %vm332, %v266, 0
      %v352 = vsel %vm332, %v267, 0
      %v355 = vsel %vm332, %v268, 0
      %357 = vmatprep.subr.bf16.mxu0 0
      %358 = vmatpush1.bf16.msra.mxu0 %v328
      %359 = vmatprep.subr.bf16.mxu0 0
      %360 = vmatpush1.bf16.msra.mxu0 %v329
      %361 = vmatprep.subr.bf16.mxu0 0
      %362 = vmatpush1.bf16.msra.mxu0 0
      %363 = vmatprep.subr.bf16.mxu0 0
      %364 = vmatpush1.bf16.msra.mxu0 0
      %365 = vmatprep.subr.bf16.mxu0 0
      %366 = vmatpush1.bf16.msra.mxu0 0
      %367 = vmatprep.subr.bf16.mxu0 0
      %368 = vmatpush1.bf16.msra.mxu0 0
      %369 = vmatprep.subr.bf16.mxu0 0
      %370 = vmatpush1.bf16.msra.mxu0 0
      %371 = vmatprep.subr.bf16.mxu0 0
      %372 = vmatpush1.bf16.msra.mxu0 0
      %373 = vmatprep.subr.bf16.mxu0 0
      %374 = vmatpush1.bf16.msra.mxu0 0
      %375 = vmatprep.subr.bf16.mxu0 0
      %376 = vmatpush1.bf16.msra.mxu0 0
      %377 = vmatprep.subr.bf16.mxu0 0
      %378 = vmatpush1.bf16.msra.mxu0 0
      %379 = vmatprep.subr.bf16.mxu0 0
      %380 = vmatpush1.bf16.msra.mxu0 0
      %381 = vmatprep.subr.bf16.mxu0 0
      %382 = vmatpush1.bf16.msra.mxu0 0
      %383 = vmatprep.subr.bf16.mxu0 0
      %384 = vmatpush1.bf16.msra.mxu0 0
      %385 = vmatprep.subr.bf16.mxu0 0
      %386 = vmatpush1.bf16.msra.mxu0 0
      %387 = vmatprep.subr.bf16.mxu0 0
      %388 = vmatpush1.bf16.msra.mxu0 0
      %389 = vmatprep.mubr.bf16.mxu0 0
      %390 = vmatmul.mubr.bf16.gmra.mrb[0].mxu0 %v334
      %v391 = vpop.f32.mrb[0].mxu0
      %v392 = vadd.f32 0.0, %v391
      %v393 = vpop.f32.mrb[0].mxu0
      %v394 = vpop.f32.mrb[0].mxu0
      %v395 = vadd.f32 0.0, %v394
      %v396 = vpop.f32.mrb[0].mxu0
      %397 = vmatprep.mubr.bf16.mxu0 0
      %398 = vmatmul.mubr.bf16.gmra.mrb[0].mxu0 %v337
      %v399 = vpop.f32.mrb[0].mxu0
      %v400 = vadd.f32 0.0, %v399
      %v401 = vpop.f32.mrb[0].mxu0
      %v402 = vpop.f32.mrb[0].mxu0
      %v403 = vadd.f32 0.0, %v402
      %v404 = vpop.f32.mrb[0].mxu0
      %405 = vmatprep.mubr.bf16.mxu0 0
      %406 = vmatmul.mubr.bf16.gmra.mrb[0].mxu0 %v340
      %v407 = vpop.f32.mrb[0].mxu0
      %v408 = vadd.f32 0.0, %v407
      %v409 = vpop.f32.mrb[0].mxu0
      %v410 = vpop.f32.mrb[0].mxu0
      %v411 = vadd.f32 0.0, %v410
      %v412 = vpop.f32.mrb[0].mxu0
      %413 = vmatprep.mubr.bf16.mxu0 0
      %414 = vmatmul.mubr.bf16.gmra.mrb[0].mxu0 %v343
      %v415 = vpop.f32.mrb[0].mxu0
      %v416 = vadd.f32 0.0, %v415
      %v417 = vpop.f32.mrb[0].mxu0
      %v418 = vpop.f32.mrb[0].mxu0
      %v419 = vadd.f32 0.0, %v418
      %v420 = vpop.f32.mrb[0].mxu0
      %421 = vmatprep.mubr.bf16.mxu0 0
      %422 = vmatmul.mubr.bf16.gmra.mrb[0].mxu0 %v346
      %v423 = vpop.f32.mrb[0].mxu0
      %v424 = vadd.f32 0.0, %v423
      %v425 = vpop.f32.mrb[0].mxu0
      %v426 = vpop.f32.mrb[0].mxu0
      %v427 = vadd.f32 0.0, %v426
      %v428 = vpop.f32.mrb[0].mxu0
      %429 = vmatprep.mubr.bf16.mxu0 0
      %430 = vmatmul.mubr.bf16.gmra.mrb[0].mxu0 %v349
      %v431 = vpop.f32.mrb[0].mxu0
      %v432 = vadd.f32 0.0, %v431
      %v433 = vpop.f32.mrb[0].mxu0
      %v434 = vpop.f32.mrb[0].mxu0
      %v435 = vadd.f32 0.0, %v434
      %v436 = vpop.f32.mrb[0].mxu0
      %437 = vmatprep.mubr.bf16.mxu0 0
      %438 = vmatmul.mubr.bf16.gmra.mrb[0].mxu0 %v352
      %v439 = vpop.f32.mrb[0].mxu0
      %v440 = vadd.f32 0.0, %v439
      %v441 = vpop.f32.mrb[0].mxu0
      %v442 = vpop.f32.mrb[0].mxu0
      %v443 = vadd.f32 0.0, %v442
      %v444 = vpop.f32.mrb[0].mxu0
      %445 = vmatprep.mubr.bf16.mxu0 0
      %446 = vmatmul.mubr.bf16.gmra.mrb[0].mxu0 %v355
      %v447 = vpop.f32.mrb[0].mxu0
      %v448 = vadd.f32 0.0, %v447
      %v449 = vpop.f32.mrb[0].mxu0
      %v450 = vpop.f32.mrb[0].mxu0
      %v451 = vadd.f32 0.0, %v450
      %v452 = vpop.f32.mrb[0].mxu0
      %453 = vdwg.mxu0
      %v454 = vmul.f32 %v392, 10.0
      %v455 = vmul.f32 %v395, 10.0
      %v456 = vmul.f32 %v400, 10.0
      %v457 = vmul.f32 %v403, 10.0
      %v458 = vmul.f32 %v408, 10.0
      %v459 = vmul.f32 %v411, 10.0
      %v460 = vmul.f32 %v416, 10.0
      %v461 = vmul.f32 %v419, 10.0
      %v462 = vmul.f32 %v424, 10.0
      %v463 = vmul.f32 %v427, 10.0
      %v464 = vmul.f32 %v432, 10.0
      %v465 = vmul.f32 %v435, 10.0
      %v466 = vmul.f32 %v440, 10.0
      %v467 = vmul.f32 %v443, 10.0
      %v468 = vmul.f32 %v448, 10.0
      %v469 = vmul.f32 %v451, 10.0
      %v471 = vlaneseq
      %v472 = vshrl.u32 %v471, 7
      %v473 = vsub.s32 0, %v472
      %v474 = vrot.slane %v319, %v473
      %v476 = vadd.f32 %v454, %v474
      %v477 = vadd.f32 %v455, %v474
      %v478 = vadd.f32 %v456, %v474
      %v479 = vadd.f32 %v457, %v474
      %v480 = vadd.f32 %v458, %v474
      %v481 = vadd.f32 %v459, %v474
      %v482 = vadd.f32 %v460, %v474
      %v483 = vadd.f32 %v461, %v474
      %v484 = vadd.f32 %v462, %v474
      %v485 = vadd.f32 %v463, %v474
      %v486 = vadd.f32 %v464, %v474
      %v487 = vadd.f32 %v465, %v474
      %v488 = vadd.f32 %v466, %v474
      %v489 = vadd.f32 %v467, %v474
      %v490 = vadd.f32 %v468, %v474
      %v491 = vadd.f32 %v469, %v474
      %v496 = vunpack.c.l.b16 %v213
      %v497 = vunpack.c.l.b16 %v214
      %v498 = vunpack.c.l.b16 %v215
      %v499 = vunpack.c.l.b16 %v216
      %v500 = vpack.c.b16 %v497, %v496
      %v501 = vpack.c.b16 %v499, %v498
      %v505 = vsel %vm332, %v311, 0
      %v508 = vsel %vm332, %v312, 0
      %v511 = vsel %vm332, %v313, 0
      %v514 = vsel %vm332, %v314, 0
      %v517 = vsel %vm332, %v315, 0
      %v520 = vsel %vm332, %v316, 0
      %v523 = vsel %vm332, %v317, 0
      %v526 = vsel %vm332, %v318, 0
      %528 = vmatprep.subr.bf16.mxu0 0
      %529 = vmatpush1.bf16.msra.mxu0 %v500
      %530 = vmatprep.subr.bf16.mxu0 0
      %531 = vmatpush1.bf16.msra.mxu0 %v501
      %532 = vmatprep.subr.bf16.mxu0 0
      %533 = vmatpush1.bf16.msra.mxu0 0
      %534 = vmatprep.subr.bf16.mxu0 0
      %535 = vmatpush1.bf16.msra.mxu0 0
      %536 = vmatprep.subr.bf16.mxu0 0
      %537 = vmatpush1.bf16.msra.mxu0 0
      %538 = vmatprep.subr.bf16.mxu0 0
      %539 = vmatpush1.bf16.msra.mxu0 0
      %540 = vmatprep.subr.bf16.mxu0 0
      %541 = vmatpush1.bf16.msra.mxu0 0
      %542 = vmatprep.subr.bf16.mxu0 0
      %543 = vmatpush1.bf16.msra.mxu0 0
      %544 = vmatprep.subr.bf16.mxu0 0
      %545 = vmatpush1.bf16.msra.mxu0 0
      %546 = vmatprep.subr.bf16.mxu0 0
      %547 = vmatpush1.bf16.msra.mxu0 0
      %548 = vmatprep.subr.bf16.mxu0 0
      %549 = vmatpush1.bf16.msra.mxu0 0
      %550 = vmatprep.subr.bf16.mxu0 0
      %551 = vmatpush1.bf16.msra.mxu0 0
      %552 = vmatprep.subr.bf16.mxu0 0
      %553 = vmatpush1.bf16.msra.mxu0 0
      %554 = vmatprep.subr.bf16.mxu0 0
      %555 = vmatpush1.bf16.msra.mxu0 0
      %556 = vmatprep.subr.bf16.mxu0 0
      %557 = vmatpush1.bf16.msra.mxu0 0
      %558 = vmatprep.subr.bf16.mxu0 0
      %559 = vmatpush1.bf16.msra.mxu0 0
      %560 = vmatprep.mubr.bf16.mxu0 0
      %561 = vmatmul.mubr.bf16.gmra.mrb[0].mxu0 %v505
      %v562 = vpop.f32.mrb[0].mxu0
      %v563 = vadd.f32 0.0, %v562
      %v564 = vpop.f32.mrb[0].mxu0
      %v565 = vpop.f32.mrb[0].mxu0
      %v566 = vadd.f32 0.0, %v565
      %v567 = vpop.f32.mrb[0].mxu0
      %568 = vmatprep.mubr.bf16.mxu0 0
      %569 = vmatmul.mubr.bf16.gmra.mrb[0].mxu0 %v508
      %v570 = vpop.f32.mrb[0].mxu0
      %v571 = vadd.f32 0.0, %v570
      %v572 = vpop.f32.mrb[0].mxu0
      %v573 = vpop.f32.mrb[0].mxu0
      %v574 = vadd.f32 0.0, %v573
      %v575 = vpop.f32.mrb[0].mxu0
      %576 = vmatprep.mubr.bf16.mxu0 0
      %577 = vmatmul.mubr.bf16.gmra.mrb[0].mxu0 %v511
      %v578 = vpop.f32.mrb[0].mxu0
      %v579 = vadd.f32 0.0, %v578
      %v580 = vpop.f32.mrb[0].mxu0
      %v581 = vpop.f32.mrb[0].mxu0
      %v582 = vadd.f32 0.0, %v581
      %v583 = vpop.f32.mrb[0].mxu0
      %584 = vmatprep.mubr.bf16.mxu0 0
      %585 = vmatmul.mubr.bf16.gmra.mrb[0].mxu0 %v514
      %v586 = vpop.f32.mrb[0].mxu0
      %v587 = vadd.f32 0.0, %v586
      %v588 = vpop.f32.mrb[0].mxu0
      %v589 = vpop.f32.mrb[0].mxu0
      %v590 = vadd.f32 0.0, %v589
      %v591 = vpop.f32.mrb[0].mxu0
      %592 = vmatprep.mubr.bf16.mxu0 0
      %593 = vmatmul.mubr.bf16.gmra.mrb[0].mxu0 %v517
      %v594 = vpop.f32.mrb[0].mxu0
      %v595 = vadd.f32 0.0, %v594
      %v596 = vpop.f32.mrb[0].mxu0
      %v597 = vpop.f32.mrb[0].mxu0
      %v598 = vadd.f32 0.0, %v597
      %v599 = vpop.f32.mrb[0].mxu0
      %600 = vmatprep.mubr.bf16.mxu0 0
      %601 = vmatmul.mubr.bf16.gmra.mrb[0].mxu0 %v520
      %v602 = vpop.f32.mrb[0].mxu0
      %v603 = vadd.f32 0.0, %v602
      %v604 = vpop.f32.mrb[0].mxu0
      %v605 = vpop.f32.mrb[0].mxu0
      %v606 = vadd.f32 0.0, %v605
      %v607 = vpop.f32.mrb[0].mxu0
      %608 = vmatprep.mubr.bf16.mxu0 0
      %609 = vmatmul.mubr.bf16.gmra.mrb[0].mxu0 %v523
      %v610 = vpop.f32.mrb[0].mxu0
      %v611 = vadd.f32 0.0, %v610
      %v612 = vpop.f32.mrb[0].mxu0
      %v613 = vpop.f32.mrb[0].mxu0
      %v614 = vadd.f32 0.0, %v613
      %v615 = vpop.f32.mrb[0].mxu0
      %616 = vmatprep.mubr.bf16.mxu0 0
      %617 = vmatmul.mubr.bf16.gmra.mrb[0].mxu0 %v526
      %v618 = vpop.f32.mrb[0].mxu0
      %v619 = vadd.f32 0.0, %v618
      %v620 = vpop.f32.mrb[0].mxu0
      %v621 = vpop.f32.mrb[0].mxu0
      %v622 = vadd.f32 0.0, %v621
      %v623 = vpop.f32.mrb[0].mxu0
      %624 = vdwg.mxu0
      %v625 = vmul.f32 %v563, 10.0
      %v626 = vmul.f32 %v566, 10.0
      %v627 = vmul.f32 %v571, 10.0
      %v628 = vmul.f32 %v574, 10.0
      %v629 = vmul.f32 %v579, 10.0
      %v630 = vmul.f32 %v582, 10.0
      %v631 = vmul.f32 %v587, 10.0
      %v632 = vmul.f32 %v590, 10.0
      %v633 = vmul.f32 %v595, 10.0
      %v634 = vmul.f32 %v598, 10.0
      %v635 = vmul.f32 %v603, 10.0
      %v636 = vmul.f32 %v606, 10.0
      %v637 = vmul.f32 %v611, 10.0
      %v638 = vmul.f32 %v614, 10.0
      %v639 = vmul.f32 %v619, 10.0
      %v640 = vmul.f32 %v622, 10.0
      %v641 = vadd.f32 %v625, %v474
      %v642 = vadd.f32 %v626, %v474
      %v643 = vadd.f32 %v627, %v474
      %v644 = vadd.f32 %v628, %v474
      %v645 = vadd.f32 %v629, %v474
      %v646 = vadd.f32 %v630, %v474
      %v647 = vadd.f32 %v631, %v474
      %v648 = vadd.f32 %v632, %v474
      %v649 = vadd.f32 %v633, %v474
      %v650 = vadd.f32 %v634, %v474
      %v651 = vadd.f32 %v635, %v474
      %v652 = vadd.f32 %v636, %v474
      %v653 = vadd.f32 %v637, %v474
      %v654 = vadd.f32 %v638, %v474
      %v655 = vadd.f32 %v639, %v474
      %v656 = vadd.f32 %v640, %v474
      %657 = vmax.xlane.f32.xlu0 %v476
      %v658 = vpop.xlane.xlu0 %657
      %659 = vmax.xlane.f32.xlu0 %v477
      %v660 = vpop.xlane.xlu0 %659
      %661 = vmax.xlane.f32.xlu0 %v478
      %v662 = vpop.xlane.xlu0 %661
      %663 = vmax.xlane.f32.xlu0 %v479
      %v664 = vpop.xlane.xlu0 %663
      %665 = vmax.xlane.f32.xlu0 %v480
      %v666 = vpop.xlane.xlu0 %665
      %667 = vmax.xlane.f32.xlu0 %v481
      %v668 = vpop.xlane.xlu0 %667
      %669 = vmax.xlane.f32.xlu0 %v482
      %v670 = vpop.xlane.xlu0 %669
      %671 = vmax.xlane.f32.xlu0 %v483
      %v672 = vpop.xlane.xlu0 %671
      %673 = vmax.xlane.f32.xlu0 %v484
      %v674 = vpop.xlane.xlu0 %673
      %675 = vmax.xlane.f32.xlu0 %v485
      %v676 = vpop.xlane.xlu0 %675
      %677 = vmax.xlane.f32.xlu0 %v486
      %v678 = vpop.xlane.xlu0 %677
      %679 = vmax.xlane.f32.xlu0 %v487
      %v680 = vpop.xlane.xlu0 %679
      %681 = vmax.xlane.f32.xlu0 %v488
      %v682 = vpop.xlane.xlu0 %681
      %683 = vmax.xlane.f32.xlu0 %v489
      %v684 = vpop.xlane.xlu0 %683
      %685 = vmax.xlane.f32.xlu0 %v490
      %v686 = vpop.xlane.xlu0 %685
      %687 = vmax.xlane.f32.xlu0 %v491
      %v688 = vpop.xlane.xlu0 %687
      %689 = vmax.xlane.f32.xlu0 %v641
      %v690 = vpop.xlane.xlu0 %689
      %691 = vmax.xlane.f32.xlu0 %v642
      %v692 = vpop.xlane.xlu0 %691
      %693 = vmax.xlane.f32.xlu0 %v643
      %v694 = vpop.xlane.xlu0 %693
      %695 = vmax.xlane.f32.xlu0 %v644
      %v696 = vpop.xlane.xlu0 %695
      %697 = vmax.xlane.f32.xlu0 %v645
      %v698 = vpop.xlane.xlu0 %697
      %699 = vmax.xlane.f32.xlu0 %v646
      %v700 = vpop.xlane.xlu0 %699
      %701 = vmax.xlane.f32.xlu0 %v647
      %v702 = vpop.xlane.xlu0 %701
      %703 = vmax.xlane.f32.xlu0 %v648
      %v704 = vpop.xlane.xlu0 %703
      %705 = vmax.xlane.f32.xlu0 %v649
      %v706 = vpop.xlane.xlu0 %705
      %707 = vmax.xlane.f32.xlu0 %v650
      %v708 = vpop.xlane.xlu0 %707
      %709 = vmax.xlane.f32.xlu0 %v651
      %v710 = vpop.xlane.xlu0 %709
      %711 = vmax.xlane.f32.xlu0 %v652
      %v712 = vpop.xlane.xlu0 %711
      %713 = vmax.xlane.f32.xlu0 %v653
      %v714 = vpop.xlane.xlu0 %713
      %715 = vmax.xlane.f32.xlu0 %v654
      %v716 = vpop.xlane.xlu0 %715
      %717 = vmax.xlane.f32.xlu0 %v655
      %v718 = vpop.xlane.xlu0 %717
      %719 = vmax.xlane.f32.xlu0 %v656
      %v720 = vpop.xlane.xlu0 %719
      %v721 = vsub.f32 %v476, %v658
      %v722 = vsub.f32 %v477, %v660
      %v723 = vsub.f32 %v478, %v662
      %v724 = vsub.f32 %v479, %v664
      %v725 = vsub.f32 %v480, %v666
      %v726 = vsub.f32 %v481, %v668
      %v727 = vsub.f32 %v482, %v670
      %v728 = vsub.f32 %v483, %v672
      %v729 = vsub.f32 %v484, %v674
      %v730 = vsub.f32 %v485, %v676
      %v731 = vsub.f32 %v486, %v678
      %v732 = vsub.f32 %v487, %v680
      %v733 = vsub.f32 %v488, %v682
      %v734 = vsub.f32 %v489, %v684
      %v735 = vsub.f32 %v490, %v686
      %v736 = vsub.f32 %v491, %v688
      %v737 = vmul.f32 %v721, 1.442695
      %v738 = vpow.pop %v737
      %v739 = vmul.f32 %v722, 1.442695
      %v740 = vpow.pop %v739
      %v741 = vmul.f32 %v723, 1.442695
      %v742 = vpow.pop %v741
      %v743 = vmul.f32 %v724, 1.442695
      %v744 = vpow.pop %v743
      %v745 = vmul.f32 %v725, 1.442695
      %v746 = vpow.pop %v745
      %v747 = vmul.f32 %v726, 1.442695
      %v748 = vpow.pop %v747
      %v749 = vmul.f32 %v727, 1.442695
      %v750 = vpow.pop %v749
      %v751 = vmul.f32 %v728, 1.442695
      %v752 = vpow.pop %v751
      %v753 = vmul.f32 %v729, 1.442695
      %v754 = vpow.pop %v753
      %v755 = vmul.f32 %v730, 1.442695
      %v756 = vpow.pop %v755
      %v757 = vmul.f32 %v731, 1.442695
      %v758 = vpow.pop %v757
      %v759 = vmul.f32 %v732, 1.442695
      %v760 = vpow.pop %v759
      %v761 = vmul.f32 %v733, 1.442695
      %v762 = vpow.pop %v761
      %v763 = vmul.f32 %v734, 1.442695
      %v764 = vpow.pop %v763
      %v765 = vmul.f32 %v735, 1.442695
      %v766 = vpow.pop %v765
      %v767 = vmul.f32 %v736, 1.442695
      %v768 = vpow.pop %v767
      %v769 = vsub.f32 %v641, %v690
      %v770 = vsub.f32 %v642, %v692
      %v771 = vsub.f32 %v643, %v694
      %v772 = vsub.f32 %v644, %v696
      %v773 = vsub.f32 %v645, %v698
      %v774 = vsub.f32 %v646, %v700
      %v775 = vsub.f32 %v647, %v702
      %v776 = vsub.f32 %v648, %v704
      %v777 = vsub.f32 %v649, %v706
      %v778 = vsub.f32 %v650, %v708
      %v779 = vsub.f32 %v651, %v710
      %v780 = vsub.f32 %v652, %v712
      %v781 = vsub.f32 %v653, %v714
      %v782 = vsub.f32 %v654, %v716
      %v783 = vsub.f32 %v655, %v718
      %v784 = vsub.f32 %v656, %v720
      %v785 = vmul.f32 %v769, 1.442695
      %v786 = vpow.pop %v785
      %v787 = vmul.f32 %v770, 1.442695
      %v788 = vpow.pop %v787
      %v789 = vmul.f32 %v771, 1.442695
      %v790 = vpow.pop %v789
      %v791 = vmul.f32 %v772, 1.442695
      %v792 = vpow.pop %v791
      %v793 = vmul.f32 %v773, 1.442695
      %v794 = vpow.pop %v793
      %v795 = vmul.f32 %v774, 1.442695
      %v796 = vpow.pop %v795
      %v797 = vmul.f32 %v775, 1.442695
      %v798 = vpow.pop %v797
      %v799 = vmul.f32 %v776, 1.442695
      %v800 = vpow.pop %v799
      %v801 = vmul.f32 %v777, 1.442695
      %v802 = vpow.pop %v801
      %v803 = vmul.f32 %v778, 1.442695
      %v804 = vpow.pop %v803
      %v805 = vmul.f32 %v779, 1.442695
      %v806 = vpow.pop %v805
      %v807 = vmul.f32 %v780, 1.442695
      %v808 = vpow.pop %v807
      %v809 = vmul.f32 %v781, 1.442695
      %v810 = vpow.pop %v809
      %v811 = vmul.f32 %v782, 1.442695
      %v812 = vpow.pop %v811
      %v813 = vmul.f32 %v783, 1.442695
      %v814 = vpow.pop %v813
      %v815 = vmul.f32 %v784, 1.442695
      %v816 = vpow.pop %v815
      %817 = vadd.xlane.f32.xlu0 %v738
      %v818 = vpop.xlane.xlu0 %817
      %819 = vadd.xlane.f32.xlu0 %v740
      %v820 = vpop.xlane.xlu0 %819
      %821 = vadd.xlane.f32.xlu0 %v742
      %v822 = vpop.xlane.xlu0 %821
      %823 = vadd.xlane.f32.xlu0 %v744
      %v824 = vpop.xlane.xlu0 %823
      %825 = vadd.xlane.f32.xlu0 %v746
      %v826 = vpop.xlane.xlu0 %825
      %827 = vadd.xlane.f32.xlu0 %v748
      %v828 = vpop.xlane.xlu0 %827
      %829 = vadd.xlane.f32.xlu0 %v750
      %v830 = vpop.xlane.xlu0 %829
      %831 = vadd.xlane.f32.xlu0 %v752
      %v832 = vpop.xlane.xlu0 %831
      %833 = vadd.xlane.f32.xlu0 %v754
      %v834 = vpop.xlane.xlu0 %833
      %835 = vadd.xlane.f32.xlu0 %v756
      %v836 = vpop.xlane.xlu0 %835
      %837 = vadd.xlane.f32.xlu0 %v758
      %v838 = vpop.xlane.xlu0 %837
      %839 = vadd.xlane.f32.xlu0 %v760
      %v840 = vpop.xlane.xlu0 %839
      %841 = vadd.xlane.f32.xlu0 %v762
      %v842 = vpop.xlane.xlu0 %841
      %843 = vadd.xlane.f32.xlu0 %v764
      %v844 = vpop.xlane.xlu0 %843
      %845 = vadd.xlane.f32.xlu0 %v766
      %v846 = vpop.xlane.xlu0 %845
      %847 = vadd.xlane.f32.xlu0 %v768
      %v848 = vpop.xlane.xlu0 %847
      %849 = vadd.xlane.f32.xlu0 %v786
      %v850 = vpop.xlane.xlu0 %849
      %851 = vadd.xlane.f32.xlu0 %v788
      %v852 = vpop.xlane.xlu0 %851
      %853 = vadd.xlane.f32.xlu0 %v790
      %v854 = vpop.xlane.xlu0 %853
      %855 = vadd.xlane.f32.xlu0 %v792
      %v856 = vpop.xlane.xlu0 %855
      %857 = vadd.xlane.f32.xlu0 %v794
      %v858 = vpop.xlane.xlu0 %857
      %859 = vadd.xlane.f32.xlu0 %v796
      %v860 = vpop.xlane.xlu0 %859
      %861 = vadd.xlane.f32.xlu0 %v798
      %v862 = vpop.xlane.xlu0 %861
      %863 = vadd.xlane.f32.xlu0 %v800
      %v864 = vpop.xlane.xlu0 %863
      %865 = vadd.xlane.f32.xlu0 %v802
      %v866 = vpop.xlane.xlu0 %865
      %867 = vadd.xlane.f32.xlu0 %v804
      %v868 = vpop.xlane.xlu0 %867
      %869 = vadd.xlane.f32.xlu0 %v806
      %v870 = vpop.xlane.xlu0 %869
      %871 = vadd.xlane.f32.xlu0 %v808
      %v872 = vpop.xlane.xlu0 %871
      %873 = vadd.xlane.f32.xlu0 %v810
      %v874 = vpop.xlane.xlu0 %873
      %875 = vadd.xlane.f32.xlu0 %v812
      %v876 = vpop.xlane.xlu0 %875
      %877 = vadd.xlane.f32.xlu0 %v814
      %v878 = vpop.xlane.xlu0 %877
      %879 = vadd.xlane.f32.xlu0 %v816
      %v880 = vpop.xlane.xlu0 %879
      %v881 = vrcp.pop %v850
      %v882 = vrcp.pop %v852
      %v883 = vrcp.pop %v854
      %v884 = vrcp.pop %v856
      %v885 = vrcp.pop %v858
      %v886 = vrcp.pop %v860
      %v887 = vrcp.pop %v862
      %v888 = vrcp.pop %v864
      %v889 = vrcp.pop %v866
      %v890 = vrcp.pop %v868
      %v891 = vrcp.pop %v870
      %v892 = vrcp.pop %v872
      %v893 = vrcp.pop %v874
      %v894 = vrcp.pop %v876
      %v895 = vrcp.pop %v878
      %v896 = vrcp.pop %v880
      %v897 = vmul.f32 %v786, %v881
      %v898 = vmul.f32 %v788, %v882
      %v899 = vmul.f32 %v790, %v883
      %v900 = vmul.f32 %v792, %v884
      %v901 = vmul.f32 %v794, %v885
      %v902 = vmul.f32 %v796, %v886
      %v903 = vmul.f32 %v798, %v887
      %v904 = vmul.f32 %v800, %v888
      %v905 = vmul.f32 %v802, %v889
      %v906 = vmul.f32 %v804, %v890
      %v907 = vmul.f32 %v806, %v891
      %v908 = vmul.f32 %v808, %v892
      %v909 = vmul.f32 %v810, %v893
      %v910 = vmul.f32 %v812, %v894
      %v911 = vmul.f32 %v814, %v895
      %v912 = vmul.f32 %v816, %v896
      %v913 = vsub.f32 %v641, %v476
      %v914 = vsub.f32 %v642, %v477
      %v915 = vsub.f32 %v643, %v478
      %v916 = vsub.f32 %v644, %v479
      %v917 = vsub.f32 %v645, %v480
      %v918 = vsub.f32 %v646, %v481
      %v919 = vsub.f32 %v647, %v482
      %v920 = vsub.f32 %v648, %v483
      %v921 = vsub.f32 %v649, %v484
      %v922 = vsub.f32 %v650, %v485
      %v923 = vsub.f32 %v651, %v486
      %v924 = vsub.f32 %v652, %v487
      %v925 = vsub.f32 %v653, %v488
      %v926 = vsub.f32 %v654, %v489
      %v927 = vsub.f32 %v655, %v490
      %v928 = vsub.f32 %v656, %v491
      %v929 = vsub.f32 %v658, %v690
      %v930 = vsub.f32 %v660, %v692
      %v931 = vsub.f32 %v662, %v694
      %v932 = vsub.f32 %v664, %v696
      %v933 = vsub.f32 %v666, %v698
      %v934 = vsub.f32 %v668, %v700
      %v935 = vsub.f32 %v670, %v702
      %v936 = vsub.f32 %v672, %v704
      %v937 = vsub.f32 %v674, %v706
      %v938 = vsub.f32 %v676, %v708
      %v939 = vsub.f32 %v678, %v710
      %v940 = vsub.f32 %v680, %v712
      %v941 = vsub.f32 %v682, %v714
      %v942 = vsub.f32 %v684, %v716
      %v943 = vsub.f32 %v686, %v718
      %v944 = vsub.f32 %v688, %v720
      %v945 = vadd.f32 %v913, %v929
      %v946 = vadd.f32 %v914, %v930
      %v947 = vadd.f32 %v915, %v931
      %v948 = vadd.f32 %v916, %v932
      %v949 = vadd.f32 %v917, %v933
      %v950 = vadd.f32 %v918, %v934
      %v951 = vadd.f32 %v919, %v935
      %v952 = vadd.f32 %v920, %v936
      %v953 = vadd.f32 %v921, %v937
      %v954 = vadd.f32 %v922, %v938
      %v955 = vadd.f32 %v923, %v939
      %v956 = vadd.f32 %v924, %v940
      %v957 = vadd.f32 %v925, %v941
      %v958 = vadd.f32 %v926, %v942
      %v959 = vadd.f32 %v927, %v943
      %v960 = vadd.f32 %v928, %v944
      %v961 = vlog2.pop %v818
      %v962 = vmul.f32 %v961, 0.6931472
      %v963 = vlog2.pop %v820
      %v964 = vmul.f32 %v963, 0.6931472
      %v965 = vlog2.pop %v822
      %v966 = vmul.f32 %v965, 0.6931472
      %v967 = vlog2.pop %v824
      %v968 = vmul.f32 %v967, 0.6931472
      %v969 = vlog2.pop %v826
      %v970 = vmul.f32 %v969, 0.6931472
      %v971 = vlog2.pop %v828
      %v972 = vmul.f32 %v971, 0.6931472
      %v973 = vlog2.pop %v830
      %v974 = vmul.f32 %v973, 0.6931472
      %v975 = vlog2.pop %v832
      %v976 = vmul.f32 %v975, 0.6931472
      %v977 = vlog2.pop %v834
      %v978 = vmul.f32 %v977, 0.6931472
      %v979 = vlog2.pop %v836
      %v980 = vmul.f32 %v979, 0.6931472
      %v981 = vlog2.pop %v838
      %v982 = vmul.f32 %v981, 0.6931472
      %v983 = vlog2.pop %v840
      %v984 = vmul.f32 %v983, 0.6931472
      %v985 = vlog2.pop %v842
      %v986 = vmul.f32 %v985, 0.6931472
      %v987 = vlog2.pop %v844
      %v988 = vmul.f32 %v987, 0.6931472
      %v989 = vlog2.pop %v846
      %v990 = vmul.f32 %v989, 0.6931472
      %v991 = vlog2.pop %v848
      %v992 = vmul.f32 %v991, 0.6931472
      %v993 = vlog2.pop %v850
      %v994 = vmul.f32 %v993, 0.6931472
      %v995 = vlog2.pop %v852
      %v996 = vmul.f32 %v995, 0.6931472
      %v997 = vlog2.pop %v854
      %v998 = vmul.f32 %v997, 0.6931472
      %v999 = vlog2.pop %v856
      %v1000 = vmul.f32 %v999, 0.6931472
      %v1001 = vlog2.pop %v858
      %v1002 = vmul.f32 %v1001, 0.6931472
      %v1003 = vlog2.pop %v860
      %v1004 = vmul.f32 %v1003, 0.6931472
      %v1005 = vlog2.pop %v862
      %v1006 = vmul.f32 %v1005, 0.6931472
      %v1007 = vlog2.pop %v864
      %v1008 = vmul.f32 %v1007, 0.6931472
      %v1009 = vlog2.pop %v866
      %v1010 = vmul.f32 %v1009, 0.6931472
      %v1011 = vlog2.pop %v868
      %v1012 = vmul.f32 %v1011, 0.6931472
      %v1013 = vlog2.pop %v870
      %v1014 = vmul.f32 %v1013, 0.6931472
      %v1015 = vlog2.pop %v872
      %v1016 = vmul.f32 %v1015, 0.6931472
      %v1017 = vlog2.pop %v874
      %v1018 = vmul.f32 %v1017, 0.6931472
      %v1019 = vlog2.pop %v876
      %v1020 = vmul.f32 %v1019, 0.6931472
      %v1021 = vlog2.pop %v878
      %v1022 = vmul.f32 %v1021, 0.6931472
      %v1023 = vlog2.pop %v880
      %v1024 = vmul.f32 %v1023, 0.6931472
      %v1025 = vsub.f32 %v962, %v994
      %v1026 = vsub.f32 %v964, %v996
      %v1027 = vsub.f32 %v966, %v998
      %v1028 = vsub.f32 %v968, %v1000
      %v1029 = vsub.f32 %v970, %v1002
      %v1030 = vsub.f32 %v972, %v1004
      %v1031 = vsub.f32 %v974, %v1006
      %v1032 = vsub.f32 %v976, %v1008
      %v1033 = vsub.f32 %v978, %v1010
      %v1034 = vsub.f32 %v980, %v1012
      %v1035 = vsub.f32 %v982, %v1014
      %v1036 = vsub.f32 %v984, %v1016
      %v1037 = vsub.f32 %v986, %v1018
      %v1038 = vsub.f32 %v988, %v1020
      %v1039 = vsub.f32 %v990, %v1022
      %v1040 = vsub.f32 %v992, %v1024
      %v1041 = vadd.f32 %v945, %v1025
      %v1042 = vadd.f32 %v946, %v1026
      %v1043 = vadd.f32 %v947, %v1027
      %v1044 = vadd.f32 %v948, %v1028
      %v1045 = vadd.f32 %v949, %v1029
      %v1046 = vadd.f32 %v950, %v1030
      %v1047 = vadd.f32 %v951, %v1031
      %v1048 = vadd.f32 %v952, %v1032
      %v1049 = vadd.f32 %v953, %v1033
      %v1050 = vadd.f32 %v954, %v1034
      %v1051 = vadd.f32 %v955, %v1035
      %v1052 = vadd.f32 %v956, %v1036
      %v1053 = vadd.f32 %v957, %v1037
      %v1054 = vadd.f32 %v958, %v1038
      %v1055 = vadd.f32 %v959, %v1039
      %v1056 = vadd.f32 %v960, %v1040
      %v1057 = vmul.f32 %v897, %v1041
      %v1058 = vmul.f32 %v898, %v1042
      %v1059 = vmul.f32 %v899, %v1043
      %v1060 = vmul.f32 %v900, %v1044
      %v1061 = vmul.f32 %v901, %v1045
      %v1062 = vmul.f32 %v902, %v1046
      %v1063 = vmul.f32 %v903, %v1047
      %v1064 = vmul.f32 %v904, %v1048
      %v1065 = vmul.f32 %v905, %v1049
      %v1066 = vmul.f32 %v906, %v1050
      %v1067 = vmul.f32 %v907, %v1051
      %v1068 = vmul.f32 %v908, %v1052
      %v1069 = vmul.f32 %v909, %v1053
      %v1070 = vmul.f32 %v910, %v1054
      %v1071 = vmul.f32 %v911, %v1055
      %v1072 = vmul.f32 %v912, %v1056
      %1073 = vadd.xlane.f32.xlu0 %v1057
      %v1074 = vpop.xlane.xlu0 %1073
      %1075 = vadd.xlane.f32.xlu0 %v1058
      %v1076 = vpop.xlane.xlu0 %1075
      %1077 = vadd.xlane.f32.xlu0 %v1059
      %v1078 = vpop.xlane.xlu0 %1077
      %1079 = vadd.xlane.f32.xlu0 %v1060
      %v1080 = vpop.xlane.xlu0 %1079
      %1081 = vadd.xlane.f32.xlu0 %v1061
      %v1082 = vpop.xlane.xlu0 %1081
      %1083 = vadd.xlane.f32.xlu0 %v1062
      %v1084 = vpop.xlane.xlu0 %1083
      %1085 = vadd.xlane.f32.xlu0 %v1063
      %v1086 = vpop.xlane.xlu0 %1085
      %1087 = vadd.xlane.f32.xlu0 %v1064
      %v1088 = vpop.xlane.xlu0 %1087
      %1089 = vadd.xlane.f32.xlu0 %v1065
      %v1090 = vpop.xlane.xlu0 %1089
      %1091 = vadd.xlane.f32.xlu0 %v1066
      %v1092 = vpop.xlane.xlu0 %1091
      %1093 = vadd.xlane.f32.xlu0 %v1067
      %v1094 = vpop.xlane.xlu0 %1093
      %1095 = vadd.xlane.f32.xlu0 %v1068
      %v1096 = vpop.xlane.xlu0 %1095
      %1097 = vadd.xlane.f32.xlu0 %v1069
      %v1098 = vpop.xlane.xlu0 %1097
      %1099 = vadd.xlane.f32.xlu0 %v1070
      %v1100 = vpop.xlane.xlu0 %1099
      %1101 = vadd.xlane.f32.xlu0 %v1071
      %v1102 = vpop.xlane.xlu0 %1101
      %1103 = vadd.xlane.f32.xlu0 %v1072
      %v1104 = vpop.xlane.xlu0 %1103
      %v1105 = vadd.f32 %v1074, %v1076
      %v1106 = vadd.f32 %v1105, %v1078
      %v1107 = vadd.f32 %v1106, %v1080
      %v1108 = vadd.f32 %v1107, %v1082
      %v1109 = vadd.f32 %v1108, %v1084
      %v1110 = vadd.f32 %v1109, %v1086
      %v1111 = vadd.f32 %v1110, %v1088
      %v1112 = vadd.f32 %v1111, %v1090
      %v1113 = vadd.f32 %v1112, %v1092
      %v1114 = vadd.f32 %v1113, %v1094
      %v1115 = vadd.f32 %v1114, %v1096
      %v1116 = vadd.f32 %v1115, %v1098
      %v1117 = vadd.f32 %v1116, %v1100
      %v1118 = vadd.f32 %v1117, %v1102
      %v1119 = vadd.f32 %v1118, %v1104
      %v1120 = vrot.slane %v1119, 4
      %v1121 = vadd.f32 %v1119, %v1120
      %v1122 = vrot.slane %v1121, 2
      %v1123 = vadd.f32 %v1121, %v1122
      %v1124 = vrot.slane %v1123, 1
      %v1125 = vadd.f32 %v1123, %v1124
      %vm1126 = vcmask 0
      %1127 = vst.msk [vmem:[%s206] sm:$0x1] %vm1126, %v1125
      %p1128 = scmp.lt.s32.totalorder %s18, 1
      %s1129 = scalar_select %p1128, %s18, 1
      %p1130 = scmp.lt.s32.totalorder %s19, 0
      %s1131 = scalar_select %p1130, %s19, 0
      %s1132 = sadd.s32 %s1131, %s1129
      %s1133 = scalar_lea.vmem %s3, %s1132
      // Predicated region
      $region33: #{criterion_pixel_pair.1} parent=31 // pred_check
        %p1134 = pneg %p119
      $region34: #{criterion_pixel_pair.1} parent=31 // pred_check_branch
        %1136 = sbr.rel (%p1134) target = $region36
      $region35: #{criterion_pixel_pair.1} parent=31 // pred_region
        _
      $region36: #{criterion_pixel_pair.1} parent=31 // pred_fallthru
        _
    $region32: #{criterion_pixel_pair.1} parent=5 // pred_fallthru
      _
    %p1137 = scmp.le.s32.totalorder 2, %s9
    // Predicated region
    $region37: #{criterion_pixel_pair.1} parent=5 // pred_check
      %p1138 = pneg %p1137
    $region38: #{criterion_pixel_pair.1} parent=5 // pred_check_branch
      %1140 = sbr.rel (%p1138) target = $region40
    $region39: #{criterion_pixel_pair.1} parent=5 // pred_region
      %s1141 = ssub.s32 %s9, 2
      // Predicated region
      $region41: #{criterion_pixel_pair.1} parent=39 // pred_check
        %p1142 = pneg %p125
      $region42: #{criterion_pixel_pair.1} parent=39 // pred_check_branch
        %1144 = sbr.rel (%p1142) target = $region44
      $region43: #{criterion_pixel_pair.1} parent=39 // pred_region
        %p1145 = scmp.lt.s32.totalorder %s20, 1
        %s1146 = scalar_select %p1145, %s20, 1
        %p1147 = scmp.lt.s32.totalorder %s21, 0
        %s1148 = scalar_select %p1147, %s21, 0
        %s1149 = sadd.s32 %s1148, %s1146
        %s1150 = scalar_lea.vmem %s3, %s1149
      $region44: #{criterion_pixel_pair.1} parent=39 // pred_fallthru
        _
    $region40: #{criterion_pixel_pair.1} parent=5 // pred_fallthru
      _
  $region6: #{criterion_pixel_pair.1} parent=0 // loop_footer
    %s13 = sadd.s32 1, %s9
  $region7: #{criterion_pixel_pair.1} parent=0 // loop_footer_branch
    %8 = sbr.rel target = $region3
  $region8: #{criterion_pixel_pair.1} parent=0 // loop_exit
    _

</llo_original>
